<compile_context>
chip_gen: v7x
topology: tpu7x:2x2x1
jax: 0.10.0
libtpu: 0.0.40
codegen_flags: <defaults>
</compile_context>

<pallas_src>
import functools

import jax
import jax.numpy as jnp
from jax.experimental import pallas as pl
from jax.experimental.pallas import tpu as pltpu


def _ce_kernel(inv_temp_ref, logits_ref, targets_ref, psum_ref,
               m_scr, s_scr, t_scr, *,
               n_rows, n_cols, tile_rows, tile_cols,
               rows_ragged, cols_ragged):
    """One (tile_rows, tile_cols) chunk of the online-logsumexp CE."""
    i = pl.program_id(0)          # row tile     (parallel)
    j = pl.program_id(1)          # class chunk  (reduction; innermost)
    n_j = pl.num_programs(1)
    inv_t = inv_temp_ref[0]       # 1 / temperature (SMEM scalar)

    # ---- init running stats at the first class chunk of this row tile ----
    @pl.when(j == 0)
    def _():
        m_scr[...] = jnp.full_like(m_scr, -jnp.inf)   # running max of raw logits
        s_scr[...] = jnp.zeros_like(s_scr)            # running sum of exp((x-m)/T)
        t_scr[...] = jnp.zeros_like(t_scr)            # raw target logit

    # ---- online logsumexp update for this chunk ---------------------------
    x = logits_ref[...].astype(jnp.float32)                          # (TN, TC)
    col = j * tile_cols + jax.lax.broadcasted_iota(jnp.int32, x.shape, 1)

    if cols_ragged:                       # ragged last class chunk: mask lanes >= C
        lane_ok = col < n_cols
        x_for_max = jnp.where(lane_ok, x, -jnp.inf)
    else:
        x_for_max = x

    m_old = m_scr[...]                                               # (TN, 1)
    m_new = jnp.maximum(m_old, jnp.max(x_for_max, axis=-1, keepdims=True))

    # Temperature folded into the single shift pass feeding exp (EUP).
    e = jnp.exp((x - m_new) * inv_t)                                 # (TN, TC)
    if cols_ragged:
        e = jnp.where(lane_ok, e, 0.0)

    corr = jnp.exp((m_old - m_new) * inv_t)          # == 0 on the first chunk
    s_scr[...] = s_scr[...] * corr + jnp.sum(e, axis=-1, keepdims=True)
    m_scr[...] = m_new

    # Target logit via one-hot select (no dynamic gather on TPU); exactly one
    # chunk contains the target column of each row.
    onehot = col == targets_ref[...]
    t_scr[...] += jnp.sum(jnp.where(onehot, x, 0.0), axis=-1, keepdims=True)

    # ---- finalize: per-row loss -> one lane-dense partial sum per tile ----
    @pl.when(j == n_j - 1)
    def _():
        loss = jnp.log(s_scr[...]) + (m_scr[...] - t_scr[...]) * inv_t   # (TN,1)
        if rows_ragged:                   # zero rows past N in the last row tile
            row = i * tile_rows + jax.lax.broadcasted_iota(
                jnp.int32, loss.shape, 0)
            loss = jnp.where(row < n_rows, loss, 0.0)
        # Broadcast the tile's partial sum over one (8, 128) vreg -> unmasked
        # full-lane store; the wrapper reads element [0, 0] of each block.
        psum_ref[...] = jnp.broadcast_to(jnp.sum(loss, keepdims=True),
                                         psum_ref.shape)


def _vmem_capacity_bytes():
    """Physical VMEM per TensorCore; conservative fallback if unqueryable."""
    try:
        cap = getattr(pltpu.get_tpu_info(), "vmem_capacity_bytes", None)
        if cap:
            return int(cap)
    except Exception:
        pass
    return 64 * 1024 * 1024      # v7x per-TC VMEM (smallest of v5e/v6e/v7x)


def _choose_tiles(n_rows, n_cols, itemsize, vmem_budget):
    """Lane-aligned class chunks + byte-capped row tiles."""
    sub = 8 if itemsize >= 4 else 16           # sublane packing multiple

    # Class chunk: full C when small, else a 128-multiple chunk so VMEM and
    # vreg pressure are bounded independent of C (online logsumexp in kernel).
    max_chunk_cols = 4096
    tile_cols = n_cols if n_cols <= max_chunk_cols else max_chunk_cols

    # Row tile sized by bytes: double-buffered native-dtype input chunk plus
    # ~4 live f32 chunk-wide temporaries, kept under ~half the scoped budget.
    bytes_per_row = tile_cols * (2 * itemsize + 4 * 4)
    budget = max(vmem_budget // 2, 4 * 1024 * 1024)
    max_rows = max(sub, budget // bytes_per_row)
    # ... and keep each per-step logits DMA in the ~2-8 MiB sweet spot.
    dma_cap_rows = max(sub, (8 * 1024 * 1024) // max(tile_cols * itemsize, 1))

    tile_rows = max(sub, (min(max_rows, dma_cap_rows) // sub) * sub)
    n_pad = ((n_rows + sub - 1) // sub) * sub
    return min(tile_rows, n_pad), tile_cols


def temperature_scaled_cross_entropy(logits, targets, temperature=1.0):
    """Mean temperature-scaled CE (matches F.cross_entropy(logits / T, targets)).

    logits:  (N, C) float array (read in native dtype; math in f32).
    targets: (N,) integer class indices in [0, C).
    Returns a float32 scalar.
    """
    n, c = logits.shape
    targets_2d = targets.astype(jnp.int32).reshape(n, 1)
    inv_temp = jnp.asarray([1.0 / float(temperature)], dtype=jnp.float32)

    itemsize = jnp.dtype(logits.dtype).itemsize
    vmem_cap = _vmem_capacity_bytes()
    # ~75% of physical VMEM, capped: ~96 MiB on v5e/v6e (128 MiB physical),
    # ~48 MiB on v7x (64 MiB per TensorCore).
    vmem_limit = max(32 * 1024 * 1024,
                     min((vmem_cap * 3) // 4, 100 * 1024 * 1024))

    tile_rows, tile_cols = _choose_tiles(n, c, itemsize, vmem_limit)
    num_row_tiles = pl.cdiv(n, tile_rows)
    num_col_tiles = pl.cdiv(c, tile_cols)

    kernel = functools.partial(
        _ce_kernel,
        n_rows=n, n_cols=c, tile_rows=tile_rows, tile_cols=tile_cols,
        rows_ragged=(n % tile_rows != 0),
        cols_ragged=(c % tile_cols != 0),
    )

    partial = pl.pallas_call(
        kernel,
        out_shape=jax.ShapeDtypeStruct((num_row_tiles * 8, 128), jnp.float32),
        grid=(num_row_tiles, num_col_tiles),
        in_specs=[
            pl.BlockSpec(memory_space=pltpu.MemorySpace.SMEM),          # 1/T
            pl.BlockSpec((tile_rows, tile_cols), lambda i, j: (i, j)),  # logits
            pl.BlockSpec((tile_rows, 1), lambda i, j: (i, 0)),          # targets
        ],
        out_specs=pl.BlockSpec((8, 128), lambda i, j: (i, 0)),
        scratch_shapes=[
            pltpu.VMEM((tile_rows, 1), jnp.float32),   # running max
            pltpu.VMEM((tile_rows, 1), jnp.float32),   # running sum
            pltpu.VMEM((tile_rows, 1), jnp.float32),   # raw target logit
        ],
        compiler_params=pltpu.CompilerParams(
            dimension_semantics=("parallel", "arbitrary"),
            vmem_limit_bytes=int(vmem_limit),
        ),
    )(inv_temp, logits, targets_2d)

    # One value per row tile at [tile*8, 0]; tiny final reduction in plain JAX
    # (keeps the row grid axis 'parallel' so v7x can use both TensorCores).
    tile_sums = partial[::8, 0]
    return jnp.sum(tile_sums) / jnp.float32(n)


if __name__ == "__main__":
    key = jax.random.PRNGKey(0)
    k_logits, k_targets = jax.random.split(key)

    N, C = 8, 16          # batch, num classes (small demo shapes)
    temperature = 2.0

    logits = jax.random.normal(k_logits, (N, C), dtype=jnp.float32)
    targets = jax.random.randint(k_targets, (N,), 0, C, dtype=jnp.int32)

    loss = temperature_scaled_cross_entropy(logits, targets, temperature)
    loss = jax.block_until_ready(loss)

    # Reference in plain JAX.
    logp = jax.nn.log_softmax(logits / temperature, axis=-1)
    ref = -jnp.mean(logp[jnp.arange(N), targets])
    assert jnp.allclose(loss, ref, atol=1e-5, rtol=1e-5), (loss, ref)

    print("KERNEL_OK")
</pallas_src>

<mosaic_0001>
module attributes {stable_mosaic.version = 11 : i64} {
  func.func @_ce_kernel(%arg0: i32, %arg1: i32, %arg2: memref<1xf32, #tpu.memory_space<smem>>, %arg3: memref<8x16xf32, #tpu.memory_space<vmem>>, %arg4: memref<8x1xi32, #tpu.memory_space<vmem>>, %arg5: memref<8x128xf32, #tpu.memory_space<vmem>>, %arg6: memref<8x1xf32, #tpu.memory_space<vmem>>, %arg7: memref<8x1xf32, #tpu.memory_space<vmem>>, %arg8: memref<8x1xf32, #tpu.memory_space<vmem>>) attributes {dimension_semantics = [#tpu.dimension_semantics<parallel>, #tpu.dimension_semantics<arbitrary>], iteration_bounds = array<i64: 1, 1>, scalar_prefetch = 0 : i64, scratch_operands = 3 : i64, tpu.core_type = #tpu.core_type<tc>, window_params = [{transform_indices = @transform_0, window_bounds = array<i64: 1>}, {transform_indices = @transform_1, window_bounds = array<i64: 8, 16>}, {transform_indices = @transform_2, window_bounds = array<i64: 8, 1>}, {transform_indices = @transform_3, window_bounds = array<i64: 8, 128>}]} {
    %c0 = arith.constant 0 : index
    %0 = memref.load %arg2[%c0] : memref<1xf32, #tpu.memory_space<smem>>
    %c0_i32 = arith.constant 0 : i32
    %1 = arith.cmpi eq, %arg1, %c0_i32 : i32
    %2 = arith.extui %1 : i1 to i32
    %c0_i32_0 = arith.constant 0 : i32
    %3 = arith.cmpi ne, %2, %c0_i32_0 : i32
    scf.if %3 {
      %cst_22 = arith.constant 0xFF800000 : f32
      %42 = vector.broadcast %cst_22 : f32 to vector<8x1xf32>
      %c0_23 = arith.constant 0 : index
      %c0_24 = arith.constant 0 : index
      %43 = vector.load %arg6[%c0_23, %c0_24] : memref<8x1xf32, #tpu.memory_space<vmem>>, vector<8x1xf32>
      tpu.vector_store %arg6[%c0_23, %c0_24], %42 {strides = array<i32>} : memref<8x1xf32, #tpu.memory_space<vmem>>, vector<8x1xf32>,
      %cst_25 = arith.constant 0.000000e+00 : f32
      %44 = vector.broadcast %cst_25 : f32 to vector<8x1xf32>
      %c0_26 = arith.constant 0 : index
      %c0_27 = arith.constant 0 : index
      %45 = vector.load %arg7[%c0_26, %c0_27] : memref<8x1xf32, #tpu.memory_space<vmem>>, vector<8x1xf32>
      tpu.vector_store %arg7[%c0_26, %c0_27], %44 {strides = array<i32>} : memref<8x1xf32, #tpu.memory_space<vmem>>, vector<8x1xf32>,
      %cst_28 = arith.constant 0.000000e+00 : f32
      %46 = vector.broadcast %cst_28 : f32 to vector<8x1xf32>
      %c0_29 = arith.constant 0 : index
      %c0_30 = arith.constant 0 : index
      %47 = vector.load %arg8[%c0_29, %c0_30] : memref<8x1xf32, #tpu.memory_space<vmem>>, vector<8x1xf32>
      tpu.vector_store %arg8[%c0_29, %c0_30], %46 {strides = array<i32>} : memref<8x1xf32, #tpu.memory_space<vmem>>, vector<8x1xf32>,
    } else {
    }
    %c0_1 = arith.constant 0 : index
    %c0_2 = arith.constant 0 : index
    %4 = vector.load %arg3[%c0_1, %c0_2] : memref<8x16xf32, #tpu.memory_space<vmem>>, vector<8x16xf32>
    %c16_i32 = arith.constant 16 : i32
    %5 = arith.muli %arg1, %c16_i32 : i32
    %6 = tpu.iota {dimensions = array<i32: 1>} : vector<8x16xi32>
    %7 = vector.broadcast %5 : i32 to vector<8x16xi32>
    %8 = arith.addi %7, %6 : vector<8x16xi32>
    %c0_3 = arith.constant 0 : index
    %c0_4 = arith.constant 0 : index
    %9 = vector.load %arg6[%c0_3, %c0_4] : memref<8x1xf32, #tpu.memory_space<vmem>>, vector<8x1xf32>
    %cst = arith.constant dense<0xFF800000> : vector<8xf32>
    %10 = vector.multi_reduction <maximumf>, %4, %cst [1] : vector<8x16xf32> to vector<8xf32>
    %11 = vector.shape_cast %10 : vector<8xf32> to vector<8x1xf32>
    %12 = arith.maximumf %9, %11 : vector<8x1xf32>
    %13 = vector.broadcast %12 : vector<8x1xf32> to vector<8x16xf32>
    %14 = arith.subf %4, %13 : vector<8x16xf32>
    %15 = vector.broadcast %0 : f32 to vector<8x16xf32>
    %16 = arith.mulf %14, %15 : vector<8x16xf32>
    %17 = math.exp %16 : vector<8x16xf32>
    %18 = arith.subf %9, %12 : vector<8x1xf32>
    %19 = vector.broadcast %0 : f32 to vector<8x1xf32>
    %20 = arith.mulf %18, %19 : vector<8x1xf32>
    %21 = math.exp %20 : vector<8x1xf32>
    %c0_5 = arith.constant 0 : index
    %c0_6 = arith.constant 0 : index
    %22 = vector.load %arg7[%c0_5, %c0_6] : memref<8x1xf32, #tpu.memory_space<vmem>>, vector<8x1xf32>
    %23 = arith.mulf %22, %21 : vector<8x1xf32>
    %cst_7 = arith.constant dense<0.000000e+00> : vector<8xf32>
    %24 = vector.multi_reduction <add>, %17, %cst_7 [1] : vector<8x16xf32> to vector<8xf32>
    %25 = vector.shape_cast %24 : vector<8xf32> to vector<8x1xf32>
    %26 = arith.addf %23, %25 : vector<8x1xf32>
    %c0_8 = arith.constant 0 : index
    %c0_9 = arith.constant 0 : index
    %27 = vector.load %arg7[%c0_8, %c0_9] : memref<8x1xf32, #tpu.memory_space<vmem>>, vector<8x1xf32>
    tpu.vector_store %arg7[%c0_8, %c0_9], %26 {strides = array<i32>} : memref<8x1xf32, #tpu.memory_space<vmem>>, vector<8x1xf32>,
    %c0_10 = arith.constant 0 : index
    %c0_11 = arith.constant 0 : index
    %28 = vector.load %arg6[%c0_10, %c0_11] : memref<8x1xf32, #tpu.memory_space<vmem>>, vector<8x1xf32>
    tpu.vector_store %arg6[%c0_10, %c0_11], %12 {strides = array<i32>} : memref<8x1xf32, #tpu.memory_space<vmem>>, vector<8x1xf32>,
    %c0_12 = arith.constant 0 : index
    %c0_13 = arith.constant 0 : index
    %29 = vector.load %arg4[%c0_12, %c0_13] : memref<8x1xi32, #tpu.memory_space<vmem>>, vector<8x1xi32>
    %30 = vector.broadcast %29 : vector<8x1xi32> to vector<8x16xi32>
    %31 = arith.cmpi eq, %8, %30 : vector<8x16xi32>
    %c0_14 = arith.constant 0 : index
    %c0_15 = arith.constant 0 : index
    %32 = vector.load %arg8[%c0_14, %c0_15] : memref<8x1xf32, #tpu.memory_space<vmem>>, vector<8x1xf32>
    %cst_16 = arith.constant 0.000000e+00 : f32
    %33 = vector.broadcast %cst_16 : f32 to vector<8x16xf32>
    %34 = arith.select %31, %4, %33 : vector<8x16xi1>, vector<8x16xf32>
    %cst_17 = arith.constant dense<0.000000e+00> : vector<8xf32>
    %35 = vector.multi_reduction <add>, %34, %cst_17 [1] : vector<8x16xf32> to vector<8xf32>
    %36 = vector.shape_cast %35 : vector<8xf32> to vector<8x1xf32>
    %37 = arith.addf %32, %36 : vector<8x1xf32>
    %c0_18 = arith.constant 0 : index
    %c0_19 = arith.constant 0 : index
    %38 = vector.load %arg8[%c0_18, %c0_19] : memref<8x1xf32, #tpu.memory_space<vmem>>, vector<8x1xf32>
    tpu.vector_store %arg8[%c0_18, %c0_19], %37 {strides = array<i32>} : memref<8x1xf32, #tpu.memory_space<vmem>>, vector<8x1xf32>,
    %c0_i32_20 = arith.constant 0 : i32
    %39 = arith.cmpi eq, %arg1, %c0_i32_20 : i32
    %40 = arith.extui %39 : i1 to i32
    %c0_i32_21 = arith.constant 0 : i32
    %41 = arith.cmpi ne, %40, %c0_i32_21 : i32
    scf.if %41 {
      %c0_22 = arith.constant 0 : index
      %c0_23 = arith.constant 0 : index
      %42 = vector.load %arg7[%c0_22, %c0_23] : memref<8x1xf32, #tpu.memory_space<vmem>>, vector<8x1xf32>
      %43 = math.log %42 : vector<8x1xf32>
      %c0_24 = arith.constant 0 : index
      %c0_25 = arith.constant 0 : index
      %44 = vector.load %arg6[%c0_24, %c0_25] : memref<8x1xf32, #tpu.memory_space<vmem>>, vector<8x1xf32>
      %c0_26 = arith.constant 0 : index
      %c0_27 = arith.constant 0 : index
      %45 = vector.load %arg8[%c0_26, %c0_27] : memref<8x1xf32, #tpu.memory_space<vmem>>, vector<8x1xf32>
      %46 = arith.subf %44, %45 : vector<8x1xf32>
      %47 = vector.broadcast %0 : f32 to vector<8x1xf32>
      %48 = arith.mulf %46, %47 : vector<8x1xf32>
      %49 = arith.addf %43, %48 : vector<8x1xf32>
      %50 = vector.shape_cast %49 : vector<8x1xf32> to vector<1x8x1xf32>
      %cst_28 = arith.constant dense<0.000000e+00> : vector<1xf32>
      %51 = vector.multi_reduction <add>, %50, %cst_28 [1, 2] : vector<1x8x1xf32> to vector<1xf32>
      %52 = vector.shape_cast %51 : vector<1xf32> to vector<1x1x1xf32>
      %53 = vector.extract %52[0, 0, 0] : f32 from vector<1x1x1xf32>
      %54 = vector.broadcast %53 : f32 to vector<1x1xf32>
      %55 = vector.shape_cast %54 : vector<1x1xf32> to vector<1x1xf32>
      %56 = vector.broadcast %55 : vector<1x1xf32> to vector<8x128xf32>
      %c0_29 = arith.constant 0 : index
      %c0_30 = arith.constant 0 : index
      %57 = vector.load %arg5[%c0_29, %c0_30] : memref<8x128xf32, #tpu.memory_space<vmem>>, vector<8x128xf32>
      tpu.vector_store %arg5[%c0_29, %c0_30], %56 {strides = array<i32>} : memref<8x128xf32, #tpu.memory_space<vmem>>, vector<8x128xf32>,
    } else {
    }
    return
  }
  func.func @transform_0(%arg0: i32, %arg1: i32) -> i32 {
    %c0_i32 = arith.constant 0 : i32
    %c0_i32_0 = arith.constant 0 : i32
    return %c0_i32 : i32
  }
  func.func @transform_1(%arg0: i32, %arg1: i32) -> (i32, i32) {
    %c0_i32 = arith.constant 0 : i32
    return %arg0, %arg1 : i32, i32
  }
  func.func @transform_2(%arg0: i32, %arg1: i32) -> (i32, i32) {
    %c0_i32 = arith.constant 0 : i32
    %c0_i32_0 = arith.constant 0 : i32
    return %arg0, %c0_i32 : i32, i32
  }
  func.func @transform_3(%arg0: i32, %arg1: i32) -> (i32, i32) {
    %c0_i32 = arith.constant 0 : i32
    %c0_i32_0 = arith.constant 0 : i32
    return %arg0, %c0_i32 : i32, i32
  }
}

</mosaic_0001>

<llo_original>
// kernel: tpu_custom_call.1
$region0: #{tpu_custom_call.1}
  #allocation0 [shape = 'u32[]', space=smem, size = 0x4, offset = 0x4, fixed_abs, tag = 'smem constant byte address 0x4 - core index']
  #allocation1 [shape = 'u32[144,128]{1,0:T(1,128)}', space=vmem, size = 0x12000, scoped, tag = 'internal scratch']
  #allocation2 [shape = 'f32[8,1]{1,0:T(8,128)}', space=vmem, size = 0x1000, scoped, tag = 'scratch operand']
  #allocation3 [shape = 'f32[8,1]{1,0:T(8,128)}', space=vmem, size = 0x1000, scoped, tag = 'scratch operand']
  #allocation4 [shape = 'f32[8,1]{1,0:T(8,128)}', space=vmem, size = 0x1000, scoped, tag = 'scratch operand']
  #allocation5 [shape = 'f32[1]{0:T(128)S(6)}', space=smem, size = 0x200, scoped, tag = 'scoped memory for tpu_custom_call.1']
  %s0 = inlined_call_operand.<no memory space> [shape: f32[1], index: 0, kind: input, shape index: {}]
  %s1 = inlined_call_operand.vmem [shape: f32[8,16], index: 1, kind: input, shape index: {}]
  %s2 = inlined_call_operand.vmem [shape: s32[8,1], index: 2, kind: input, shape index: {}]
  %s3 = inlined_call_operand.hbm [shape: f32[8,128], index: 3, kind: output, shape index: {}]
  %s4 = sld [smem:[#allocation0]]
  $region30: #{tpu_custom_call.1} parent=0
    _
  %s6 = ssub.s32 1, %s4
  %s7 = scalar_select 0, %s6, %s4
  %8 = sst [smem:[#allocation5]] %s0
  $region1: #{tpu_custom_call.1} parent=0
    #allocation6 [shape = 'u8[4096]{0}', space=vmem, size = 0x1000, scoped, tag = 'output window, operand 0, single buffered']
    #allocation7 [shape = 's32[1]{0}', space=sflag, size = 0x4, scoped, tag = 'scoped memory for tpu_custom_call.1']
    %9 = vsyncpa [#allocation7], 0
    // Predicated region
    $region2: #{tpu_custom_call.1} parent=1 // pred_check
      _
    $region3: #{tpu_custom_call.1} parent=1 // pred_check_branch
      %11 = sbr.rel (0) target = $region5
    $region4: #{tpu_custom_call.1} parent=1 // pred_region
      _
    $region5: #{tpu_custom_call.1} parent=1 // pred_fallthru
      _
    // Predicated region
    $region6: #{tpu_custom_call.1} parent=1 // pred_check
      _
    $region7: #{tpu_custom_call.1} parent=1 // pred_check_branch
      %13 = sbr.rel (0) target = $region9
    $region8: #{tpu_custom_call.1} parent=1 // pred_region
      _
    $region9: #{tpu_custom_call.1} parent=1 // pred_fallthru
      _
    // Predicated region
    $region10: #{tpu_custom_call.1} parent=1 // pred_check
      _
    $region11: #{tpu_custom_call.1} parent=1 // pred_check_branch
      %15 = sbr.rel (0) target = $region13
    $region12: #{tpu_custom_call.1} parent=1 // pred_region
      _
    $region13: #{tpu_custom_call.1} parent=1 // pred_fallthru
      _
    %s16 = sld [smem:[#allocation5]]
    %p17 = scmp.eq.s32.totalorder 0, 0
    // Predicated region
    $region14: #{tpu_custom_call.1} parent=1 // pred_check
      %p18 = pneg %p17
    $region15: #{tpu_custom_call.1} parent=1 // pred_check_branch
      %20 = sbr.rel (%p18) target = $region17
    $region16: #{tpu_custom_call.1} parent=1 // pred_region
      %vm21 = vcmask 7168
      %22 = vst.msk [vmem:[#allocation2] sm:$0xff] %vm21, -inf
      %23 = vst.msk [vmem:[#allocation3] sm:$0xff] %vm21, 0.0
      %24 = vst.msk [vmem:[#allocation4] sm:$0xff] %vm21, 0.0
    $region17: #{tpu_custom_call.1} parent=1 // pred_fallthru
      _
    %v25 = vld [vmem:[%s1] sm:$0xff]
    %s26 = smul.u32 0, 16
    %v27 = vlaneseq
    %v28 = vand.u32 %v27, 127
    %v29 = vstv %s26
    %v30 = vadd.s32 %v29, %v28
    %v31 = vld [vmem:[#allocation2] sm:$0xff]
    %vm32 = vcmask 130048
    %v33 = vsel %vm32, %v25, -inf
    %34 = vmax.xlane.f32.xlu0 %v33
    %v35 = vpop.xlane.xlu0 %34
    %v36 = vmax.f32 %v31, %v35
    %38 = vset.pattern.permute.xlu0 0
    %39 = vperm.xlu0 %38, %v36
    %v40 = vpop.permute.xlu0 %39
    %v42 = vsub.f32 %v25, %v40
    %v43 = vstv %s16
    %v44 = vmul.f32 %v42, %v43
    %v45 = vmul.f32 %v44, 1.442695
    %v46 = vpow.pop %v45
    %v47 = vsub.f32 %v31, %v36
    %v48 = vmul.f32 %v47, %v43
    %v49 = vmul.f32 %v48, 1.442695
    %v50 = vpow.pop %v49
    %v51 = vld [vmem:[#allocation3] sm:$0xff]
    %v52 = vmul.f32 %v51, %v50
    %v53 = vsel %vm32, %v46, 0.0
    %54 = vadd.xlane.f32.xlu0 %v53
    %v55 = vpop.xlane.xlu0 %54
    %v56 = vadd.f32 %v52, %v55
    %vm57 = vcmask 7168
    %58 = vst.msk [vmem:[#allocation3] sm:$0xff] %vm57, %v56
    %59 = vst.msk [vmem:[#allocation2] sm:$0xff] %vm57, %v36
    %v60 = vld [vmem:[%s2] sm:$0xff]
    %61 = vset.pattern.permute.xlu0 0
    %62 = vperm.xlu0 %61, %v60
    %v63 = vpop.permute.xlu0 %62
    %vm64 = vcmp.eq.s32.totalorder %v30, %v63
    %v65 = vld [vmem:[#allocation4] sm:$0xff]
    %v66 = vsel %vm64, %v25, 0.0
    %v67 = vsel %vm32, %v66, 0.0
    %68 = vadd.xlane.f32.xlu0 %v67
    %v69 = vpop.xlane.xlu0 %68
    %v70 = vadd.f32 %v65, %v69
    %71 = vst.msk [vmem:[#allocation4] sm:$0xff] %vm57, %v70
    // Predicated region
    $region18: #{tpu_custom_call.1} parent=1 // pred_check
      %p72 = pneg %p17
    $region19: #{tpu_custom_call.1} parent=1 // pred_check_branch
      %74 = sbr.rel (%p72) target = $region21
    $region20: #{tpu_custom_call.1} parent=1 // pred_region
      %v75 = vld [vmem:[#allocation3] sm:$0xff]
      %v76 = vlog2.pop %v75
      %v77 = vmul.f32 %v76, 0.6931472
      %v78 = vld [vmem:[#allocation2] sm:$0xff]
      %v79 = vld [vmem:[#allocation4] sm:$0xff]
      %v80 = vsub.f32 %v78, %v79
      %v81 = vmul.f32 %v80, %v43
      %v82 = vadd.f32 %v77, %v81
      %v83 = vsel %vm57, %v82, 0.0
      %84 = vadd.xlane.f32.xlu0 %v83
      %v85 = vpop.xlane.xlu0 %84
      %v86 = vrot.slane %v85, 4
      %v87 = vadd.f32 %v85, %v86
      %v88 = vrot.slane %v87, 2
      %v89 = vadd.f32 %v87, %v88
      %v90 = vrot.slane %v89, 1
      %v91 = vadd.f32 %v89, %v90
      %s92 = vtos %v91
      %v93 = vstv %s92
      %94 = vst [vmem:[#allocation6] sm:$0xff] %v93
    $region21: #{tpu_custom_call.1} parent=1 // pred_fallthru
      _
    // Predicated region
    $region22: #{tpu_custom_call.1} parent=1 // pred_check
      _
    $region23: #{tpu_custom_call.1} parent=1 // pred_check_branch
      %96 = sbr.rel (0) target = $region25
    $region24: #{tpu_custom_call.1} parent=1 // pred_region
      %s98 = ssub.s32 128, 128
      %99 = vsyncadd [#allocation7], %s98
      %s101 = sshll.u32 [#allocation6], 4
      %s102 = int_to_ptr.vmem [resolvable:$true] %s101
      %104 = dma.vmem_to_hbm [thread:$0]  %s102, 128, %s3, [#allocation7]
    $region25: #{tpu_custom_call.1} parent=1 // pred_fallthru
      _
    // Predicated region
    $region26: #{tpu_custom_call.1} parent=1 // pred_check
      _
    $region27: #{tpu_custom_call.1} parent=1 // pred_check_branch
      %106 = sbr.rel (0) target = $region29
    $region28: #{tpu_custom_call.1} parent=1 // pred_region
      %107 = dma.done [#allocation7], 128
    $region29: #{tpu_custom_call.1} parent=1 // pred_fallthru
      _
    %108 = vsyncpa [#allocation7], 1

</llo_original>
